<compile_context>
chip_gen: v6e
topology: v6e:2x2x1
jax: 0.10.0
libtpu: 0.0.40
codegen_flags: <defaults>
</compile_context>

<pallas_src>
import functools
import math

import jax
import jax.numpy as jnp
from jax.experimental import pallas as pl
from jax.experimental.pallas import tpu as pltpu

MIN_VARIANCE = 0.001          # keep_variance() constant
SOFTMAX_EPS = 1e-5            # eps inside adf.Softmax.forward
LOSS_EPS = 1e-5               # eps of SoftmaxHeteroscedasticLoss.forward
PRECISION = 1.0 / (MIN_VARIANCE + LOSS_EPS)       # Python float (trace-time)
LOG_TERM = math.log(MIN_VARIANCE + LOSS_EPS)      # Python float (trace-time)

# ~1 MiB of f32 per input per grid step: big, lane-dense DMAs, yet
# 3 inputs x 2 pipeline buffers x 1 MiB stays well under scoped VMEM everywhere.
_TARGET_BLOCK_ELEMS = 256 * 1024


def _choose_tile_s(n_channels: int, spatial: int) -> int:
    tile = max(128, (_TARGET_BLOCK_ELEMS // max(n_channels, 1)) // 128 * 128)
    if spatial <= tile:
        return spatial          # full spatial extent (always a legal block dim)
    return tile                 # multiple of 128


def _partial_loss_kernel(mean_ref, var_ref, tgt_ref, out_ref, *, spatial, tile_s):
    # Cast on the loaded tile (inputs may be bf16 etc.); no wrapper-side cast.
    m = mean_ref[0].astype(jnp.float32)       # (C, tile_s)
    v = var_ref[0].astype(jnp.float32)
    t = tgt_ref[0].astype(jnp.float32)
    n_channels = m.shape[0]

    # ADF softmax mean (log-normal approximation) over the channel axis.
    lgm = jnp.exp(m + 0.5 * v)
    const = jnp.sum(lgm, axis=0, keepdims=True) + SOFTMAX_EPS      # (1, tile_s)
    # Compute the reciprocal on the (1, tile_s) row only, then multiply: keeps
    # the divide off the (C, tile_s) hot path.  (pl.reciprocal(..., approx=True)
    # would move it fully onto the EUP at ~1e-3 relative error.)
    out_mean = lgm * (1.0 / const)

    diff = t - out_mean
    sq = diff * diff

    if spatial % tile_s != 0:
        # Mask out-of-range lanes of the last (ragged) spatial tile.
        s_tile = pl.program_id(1)
        lane = jax.lax.broadcasted_iota(jnp.int32, sq.shape, 1)
        sq = jnp.where(s_tile * tile_s + lane < spatial, sq, 0.0)

    # Per-channel partial sums, written lane-dense into this step's own output
    # block (no resident accumulator -> both grid axes stay fully parallel).
    row_sums = jnp.sum(sq, axis=-1, keepdims=True)                 # (C, 1)
    lane0 = jax.lax.broadcasted_iota(jnp.int32, (n_channels, 128), 1) == 0
    out_ref[0] = jnp.where(lane0, row_sums, 0.0)


@jax.jit
def softmax_heteroscedastic_loss(features_mean, features_variance, targets):
    """SoftmaxHeteroscedasticLoss((features_mean, features_variance), targets)."""
    B, C, H, W = features_mean.shape
    S = H * W
    # Reshape only (free, no HBM pass); keep native dtype.
    m = features_mean.reshape(B, C, S)
    v = features_variance.reshape(B, C, S)
    t = targets.reshape(B, C, S)

    tile_s = _choose_tile_s(C, S)
    ns = pl.cdiv(S, tile_s)
    n_total = float(B * C * S)                # torch.mean over all elements

    kernel = functools.partial(_partial_loss_kernel, spatial=S, tile_s=tile_s)
    in_spec = pl.BlockSpec((1, C, tile_s), lambda b, s: (b, 0, s))
    out_spec = pl.BlockSpec((1, C, 128), lambda b, s: (b * ns + s, 0, 0))

    partial_sums = pl.pallas_call(
        kernel,
        out_shape=jax.ShapeDtypeStruct((B * ns, C, 128), jnp.float32),
        grid_spec=pltpu.PrefetchScalarGridSpec(
            num_scalar_prefetch=0,
            grid=(B, ns),
            in_specs=[in_spec, in_spec, in_spec],
            out_specs=out_spec,
        ),
        compiler_params=pltpu.CompilerParams(
            dimension_semantics=("parallel", "parallel"),
            vmem_limit_bytes=32 * 1024 * 1024,
        ),
    )(m, v, t)

    # Final tiny reduction + hoisted constants, fused by XLA under this jit.
    total_sq = jnp.sum(partial_sums)
    return 0.5 * PRECISION * total_sq / n_total + 0.5 * LOG_TERM


def reference_loss(features_mean, features_variance, targets):
    # Pure-JAX reference mirroring the PyTorch module.
    lgm = jnp.exp(features_mean.astype(jnp.float32)
                  + 0.5 * features_variance.astype(jnp.float32))
    const = jnp.sum(lgm, axis=1, keepdims=True) + SOFTMAX_EPS
    out_mean = lgm / const
    out_var = MIN_VARIANCE                     # keep_variance_fn
    precision = 1.0 / (out_var + LOSS_EPS)
    return jnp.mean(0.5 * precision * (targets.astype(jnp.float32) - out_mean) ** 2
                    + 0.5 * jnp.log(out_var + LOSS_EPS))


if __name__ == "__main__":
    key = jax.random.PRNGKey(0)
    k_mean, k_var, k_tgt = jax.random.split(key, 3)

    B, C, H, W = 2, 4, 16, 16                  # NCHW, softmax over C
    features_mean = jax.random.normal(k_mean, (B, C, H, W), dtype=jnp.float32)
    # variances come from an ADF network head -> strictly positive
    features_var = jax.nn.softplus(
        jax.random.normal(k_var, (B, C, H, W), dtype=jnp.float32))
    targets = jax.random.uniform(k_tgt, (B, C, H, W), dtype=jnp.float32)

    loss = softmax_heteroscedastic_loss(features_mean, features_var, targets)
    loss = jax.block_until_ready(loss)

    ref = reference_loss(features_mean, features_var, targets)
    assert jnp.allclose(loss, ref, rtol=1e-5, atol=1e-6), (loss, ref)

    print("KERNEL_OK")
</pallas_src>

<mosaic_0001>
module attributes {stable_mosaic.version = 11 : i64} {
  func.func @_partial_loss_kernel(%arg0: i32, %arg1: i32, %arg2: memref<1x4x256xf32, #tpu.memory_space<vmem>>, %arg3: memref<1x4x256xf32, #tpu.memory_space<vmem>>, %arg4: memref<1x4x256xf32, #tpu.memory_space<vmem>>, %arg5: memref<1x4x128xf32, #tpu.memory_space<vmem>>) attributes {dimension_semantics = [#tpu.dimension_semantics<parallel>, #tpu.dimension_semantics<parallel>], iteration_bounds = array<i64: 2, 1>, scalar_prefetch = 0 : i64, scratch_operands = 0 : i64, tpu.core_type = #tpu.core_type<tc>, window_params = [{transform_indices = @transform_0, window_bounds = array<i64: 1, 4, 256>}, {transform_indices = @transform_1, window_bounds = array<i64: 1, 4, 256>}, {transform_indices = @transform_2, window_bounds = array<i64: 1, 4, 256>}, {transform_indices = @transform_3, window_bounds = array<i64: 1, 4, 128>}]} {
    %c0 = arith.constant 0 : index
    %c0_0 = arith.constant 0 : index
    %c0_1 = arith.constant 0 : index
    %0 = vector.load %arg2[%c0, %c0_0, %c0_1] : memref<1x4x256xf32, #tpu.memory_space<vmem>>, vector<1x4x256xf32>
    %1 = vector.shape_cast %0 : vector<1x4x256xf32> to vector<4x256xf32>
    %c0_2 = arith.constant 0 : index
    %c0_3 = arith.constant 0 : index
    %c0_4 = arith.constant 0 : index
    %2 = vector.load %arg3[%c0_2, %c0_3, %c0_4] : memref<1x4x256xf32, #tpu.memory_space<vmem>>, vector<1x4x256xf32>
    %3 = vector.shape_cast %2 : vector<1x4x256xf32> to vector<4x256xf32>
    %c0_5 = arith.constant 0 : index
    %c0_6 = arith.constant 0 : index
    %c0_7 = arith.constant 0 : index
    %4 = vector.load %arg4[%c0_5, %c0_6, %c0_7] : memref<1x4x256xf32, #tpu.memory_space<vmem>>, vector<1x4x256xf32>
    %5 = vector.shape_cast %4 : vector<1x4x256xf32> to vector<4x256xf32>
    %cst = arith.constant 5.000000e-01 : f32
    %6 = vector.broadcast %cst : f32 to vector<4x256xf32>
    %7 = arith.mulf %6, %3 : vector<4x256xf32>
    %8 = arith.addf %1, %7 : vector<4x256xf32>
    %9 = math.exp %8 : vector<4x256xf32>
    %cst_8 = arith.constant dense<0.000000e+00> : vector<256xf32>
    %10 = vector.multi_reduction <add>, %9, %cst_8 [0] : vector<4x256xf32> to vector<256xf32>
    %11 = vector.shape_cast %10 : vector<256xf32> to vector<1x256xf32>
    %cst_9 = arith.constant 9.99999974E-6 : f32
    %12 = vector.broadcast %cst_9 : f32 to vector<1x256xf32>
    %13 = arith.addf %11, %12 : vector<1x256xf32>
    %cst_10 = arith.constant 1.000000e+00 : f32
    %14 = vector.broadcast %cst_10 : f32 to vector<1x256xf32>
    %15 = arith.divf %14, %13 : vector<1x256xf32>
    %16 = vector.broadcast %15 : vector<1x256xf32> to vector<4x256xf32>
    %17 = arith.mulf %9, %16 : vector<4x256xf32>
    %18 = arith.subf %5, %17 : vector<4x256xf32>
    %19 = arith.mulf %18, %18 : vector<4x256xf32>
    %cst_11 = arith.constant dense<0.000000e+00> : vector<4xf32>
    %20 = vector.multi_reduction <add>, %19, %cst_11 [1] : vector<4x256xf32> to vector<4xf32>
    %21 = vector.shape_cast %20 : vector<4xf32> to vector<4x1xf32>
    %22 = tpu.iota {dimensions = array<i32: 1>} : vector<4x128xi32>
    %c0_i32 = arith.constant 0 : i32
    %23 = vector.broadcast %c0_i32 : i32 to vector<4x128xi32>
    %24 = arith.cmpi eq, %22, %23 : vector<4x128xi32>
    %cst_12 = arith.constant 0.000000e+00 : f32
    %25 = vector.shape_cast %21 : vector<4x1xf32> to vector<4x1xf32>
    %26 = vector.broadcast %25 : vector<4x1xf32> to vector<4x128xf32>
    %27 = vector.broadcast %cst_12 : f32 to vector<4x128xf32>
    %28 = arith.select %24, %26, %27 : vector<4x128xi1>, vector<4x128xf32>
    %c0_13 = arith.constant 0 : index
    %c0_14 = arith.constant 0 : index
    %c0_15 = arith.constant 0 : index
    %29 = vector.load %arg5[%c0_13, %c0_14, %c0_15] : memref<1x4x128xf32, #tpu.memory_space<vmem>>, vector<1x4x128xf32>
    %30 = vector.shape_cast %29 : vector<1x4x128xf32> to vector<4x128xf32>
    %31 = vector.shape_cast %28 : vector<4x128xf32> to vector<1x4x128xf32>
    tpu.vector_store %arg5[%c0_13, %c0_14, %c0_15], %31 {strides = array<i32>} : memref<1x4x128xf32, #tpu.memory_space<vmem>>, vector<1x4x128xf32>,
    return
  }
  func.func @transform_0(%arg0: i32, %arg1: i32) -> (i32, i32, i32) {
    %c0_i32 = arith.constant 0 : i32
    %c0_i32_0 = arith.constant 0 : i32
    return %arg0, %c0_i32, %arg1 : i32, i32, i32
  }
  func.func @transform_1(%arg0: i32, %arg1: i32) -> (i32, i32, i32) {
    %c0_i32 = arith.constant 0 : i32
    %c0_i32_0 = arith.constant 0 : i32
    return %arg0, %c0_i32, %arg1 : i32, i32, i32
  }
  func.func @transform_2(%arg0: i32, %arg1: i32) -> (i32, i32, i32) {
    %c0_i32 = arith.constant 0 : i32
    %c0_i32_0 = arith.constant 0 : i32
    return %arg0, %c0_i32, %arg1 : i32, i32, i32
  }
  func.func @transform_3(%arg0: i32, %arg1: i32) -> (i32, i32, i32) {
    %c1_i32 = arith.constant 1 : i32
    %0 = arith.muli %arg0, %c1_i32 : i32
    %1 = arith.addi %0, %arg1 : i32
    %c0_i32 = arith.constant 0 : i32
    %c0_i32_0 = arith.constant 0 : i32
    %c0_i32_1 = arith.constant 0 : i32
    return %1, %c0_i32, %c0_i32_0 : i32, i32, i32
  }
}

</mosaic_0001>

<llo_original>
// kernel: softmax_heteroscedastic_loss.1
$region0: #{softmax_heteroscedastic_loss.1}
  #allocation0 [shape = 'u32[]', space=smem, size = 0x4, offset = 0x4, fixed_abs, tag = 'smem constant byte address 0x4 - core index']
  #allocation1 [shape = 'u32[144,128]{1,0:T(1,128)}', space=vmem, size = 0x12000, scoped, tag = 'internal scratch']
  %s0 = inlined_call_operand.vmem [shape: f32[2,4,256], index: 0, kind: input, shape index: {}]
  %s1 = inlined_call_operand.vmem [shape: f32[2,4,256], index: 1, kind: input, shape index: {}]
  %s2 = inlined_call_operand.vmem [shape: f32[2,4,256], index: 2, kind: input, shape index: {}]
  %s3 = inlined_call_operand.vmem [shape: f32[2,4,128], index: 3, kind: output, shape index: {}]
  %s4 = sld [smem:[#allocation0]]
  $region45: #{softmax_heteroscedastic_loss.1} parent=0
    _
  %s6 = ssub.s32 1, %s4
  %s7 = scalar_select 0, %s6, %s4
  loop: start=0, step=1, limit=4
  $region2: #{softmax_heteroscedastic_loss.1} parent=0 // loop_pre_header
    _
  $region3: #{softmax_heteroscedastic_loss.1} parent=0 // loop_header
    %s9 = sphi 0, %s13
    %p10 = scmp.ge.s32.totalorder %s9, 4
    %s16 = sphi 0, %s28
    %s17 = sphi 0, %s24
    %s18 = sphi 0, %s16
    %s19 = sphi 0, %s17
    %s20 = sphi 0, %s18
    %s21 = sphi 0, %s19
    %s33 = sphi 0, %s35
    %s36 = sphi 0, %s33
    %s37 = sphi 0, %s36
    %s53 = sphi 0, %s37
    %s61 = sphi 0, %s63
    %s64 = sphi 0, %s61
    %s65 = sphi 0, %s64
    %s81 = sphi 0, %s65
    %s89 = sphi 0, %s91
    %s92 = sphi 0, %s89
    %s93 = sphi 0, %s92
    %s109 = sphi 0, %s93
    %s117 = sphi 0, %s119
    %s120 = sphi 0, %s117
    %s121 = sphi 0, %s120
    %s137 = sphi 0, %s121
  $region4: #{softmax_heteroscedastic_loss.1} parent=0 // loop_header_branch
    %12 = sbr.rel (%p10) target = $region8
  $region5: #{softmax_heteroscedastic_loss.1} parent=0 // loop_body
    %s14 = ssub.s32 %s9, 1
    %s15 = ssub.s32 %s9, 2
    %s22 = sadd.s32 1, %s17
    %p23 = scmp.ge.s32.totalorder %s22, 1
    %s24 = scalar_select %p23, 0, %s22
    %s25 = sadd.s32 1, %s16
    %s26 = scalar_select %p23, %s25, %s16
    %p27 = scmp.ge.s32.totalorder %s26, 2
    %s28 = scalar_select %p27, 0, %s26
    %s29 = ssub.s32 %s16, %s28
    %s30 = ssub.s32 %s17, %s24
    %s31 = sor.u32 %s29, %s30
    %p32 = scmp.eq.s32.totalorder %s31, 0
    %s34 = sadd.s32 %s33, 1
    %s35 = scalar_select %p32, %s33, %s34
    %p38 = pneg %p32
    %p39 = scmp.eq.s32.totalorder %s9, 1
    %p40 = por %p38, %p39
    %p41 = scmp.ne.s32.totalorder %s33, %s36
    %p42 = scmp.eq.s32.totalorder %s9, 0
    %p43 = por %p41, %p42
    %p44 = scmp.ne.s32.totalorder %s33, %s36
    %p45 = scmp.eq.s32.totalorder %s14, 1
    %p46 = por %p44, %p45
    %p47 = scmp.ne.s32.totalorder %s36, %s37
    %p48 = scmp.eq.s32.totalorder %s14, 0
    %p49 = por %p47, %p48
    %p50 = scmp.ne.s32.totalorder %s36, %s37
    %p51 = scmp.eq.s32.totalorder %s15, 1
    %p52 = por %p50, %p51
    %p54 = scmp.ne.s32.totalorder %s37, %s53
    %p55 = scmp.eq.s32.totalorder %s15, 0
    %p56 = por %p54, %p55
    %s57 = ssub.s32 %s16, %s28
    %s58 = ssub.s32 %s17, %s24
    %s59 = sor.u32 %s57, %s58
    %p60 = scmp.eq.s32.totalorder %s59, 0
    %s62 = sadd.s32 %s61, 1
    %s63 = scalar_select %p60, %s61, %s62
    %p66 = pneg %p60
    %p67 = scmp.eq.s32.totalorder %s9, 1
    %p68 = por %p66, %p67
    %p69 = scmp.ne.s32.totalorder %s61, %s64
    %p70 = scmp.eq.s32.totalorder %s9, 0
    %p71 = por %p69, %p70
    %p72 = scmp.ne.s32.totalorder %s61, %s64
    %p73 = scmp.eq.s32.totalorder %s14, 1
    %p74 = por %p72, %p73
    %p75 = scmp.ne.s32.totalorder %s64, %s65
    %p76 = scmp.eq.s32.totalorder %s14, 0
    %p77 = por %p75, %p76
    %p78 = scmp.ne.s32.totalorder %s64, %s65
    %p79 = scmp.eq.s32.totalorder %s15, 1
    %p80 = por %p78, %p79
    %p82 = scmp.ne.s32.totalorder %s65, %s81
    %p83 = scmp.eq.s32.totalorder %s15, 0
    %p84 = por %p82, %p83
    %s85 = ssub.s32 %s16, %s28
    %s86 = ssub.s32 %s17, %s24
    %s87 = sor.u32 %s85, %s86
    %p88 = scmp.eq.s32.totalorder %s87, 0
    %s90 = sadd.s32 %s89, 1
    %s91 = scalar_select %p88, %s89, %s90
    %p94 = pneg %p88
    %p95 = scmp.eq.s32.totalorder %s9, 1
    %p96 = por %p94, %p95
    %p97 = scmp.ne.s32.totalorder %s89, %s92
    %p98 = scmp.eq.s32.totalorder %s9, 0
    %p99 = por %p97, %p98
    %p100 = scmp.ne.s32.totalorder %s89, %s92
    %p101 = scmp.eq.s32.totalorder %s14, 1
    %p102 = por %p100, %p101
    %p103 = scmp.ne.s32.totalorder %s92, %s93
    %p104 = scmp.eq.s32.totalorder %s14, 0
    %p105 = por %p103, %p104
    %p106 = scmp.ne.s32.totalorder %s92, %s93
    %p107 = scmp.eq.s32.totalorder %s15, 1
    %p108 = por %p106, %p107
    %p110 = scmp.ne.s32.totalorder %s93, %s109
    %p111 = scmp.eq.s32.totalorder %s15, 0
    %p112 = por %p110, %p111
    %s113 = sadd.s32 %s16, %s17
    %s114 = sadd.s32 %s28, %s24
    %s115 = ssub.s32 %s113, %s114
    %p116 = scmp.eq.s32.totalorder %s115, 0
    %s118 = sadd.s32 %s117, 1
    %s119 = scalar_select %p116, %s117, %s118
    %p122 = pneg %p116
    %p123 = scmp.eq.s32.totalorder %s9, 1
    %p124 = por %p122, %p123
    %p125 = scmp.ne.s32.totalorder %s117, %s120
    %p126 = scmp.eq.s32.totalorder %s9, 0
    %p127 = por %p125, %p126
    %p128 = scmp.ne.s32.totalorder %s117, %s120
    %p129 = scmp.eq.s32.totalorder %s14, 1
    %p130 = por %p128, %p129
    %p131 = scmp.ne.s32.totalorder %s120, %s121
    %p132 = scmp.eq.s32.totalorder %s14, 0
    %p133 = por %p131, %p132
    %p134 = scmp.ne.s32.totalorder %s120, %s121
    %p135 = scmp.eq.s32.totalorder %s15, 1
    %p136 = por %p134, %p135
    %p138 = scmp.ne.s32.totalorder %s121, %s137
    %p139 = scmp.eq.s32.totalorder %s15, 0
    %p140 = por %p138, %p139
    %p141 = scmp.le.s32.totalorder 1, %s9
    %p142 = scmp.lt.s32.totalorder %s9, 3
    %p143 = pnand %p141, %p142
    %p144 = pneg %p143
    // Predicated region
    $region9: #{softmax_heteroscedastic_loss.1} parent=5 // pred_check
      _
    $region10: #{softmax_heteroscedastic_loss.1} parent=5 // pred_check_branch
      %146 = sbr.rel (%p143) target = $region12
    $region11: #{softmax_heteroscedastic_loss.1} parent=5 // pred_region
      %s147 = ssub.s32 %s9, 1
    $region12: #{softmax_heteroscedastic_loss.1} parent=5 // pred_fallthru
      _
    %p148 = scmp.lt.s32.totalorder %s9, 2
    // Predicated region
    $region13: #{softmax_heteroscedastic_loss.1} parent=5 // pred_check
      %p149 = pneg %p148
    $region14: #{softmax_heteroscedastic_loss.1} parent=5 // pred_check_branch
      %151 = sbr.rel (%p149) target = $region16
    $region15: #{softmax_heteroscedastic_loss.1} parent=5 // pred_region
      // Predicated region
      $region17: #{softmax_heteroscedastic_loss.1} parent=15 // pred_check
        %p152 = pneg %p43
      $region18: #{softmax_heteroscedastic_loss.1} parent=15 // pred_check_branch
        %154 = sbr.rel (%p152) target = $region20
      $region19: #{softmax_heteroscedastic_loss.1} parent=15 // pred_region
        %s155 = smul.u32 2, %s17
        %p156 = scmp.lt.s32.totalorder %s16, 1
        %s157 = scalar_select %p156, %s16, 1
        %p158 = scmp.lt.s32.totalorder %s155, 1
        %s159 = scalar_select %p158, %s155, 1
        %s160 = smul.addr %s157, 2
        %s161 = sadd.s32 %s159, %s160
        %s162 = smul.addr %s161, 4
        %s163 = scalar_lea.vmem %s0, %s162
        %s164 = smul.u32 2, %s17
      $region20: #{softmax_heteroscedastic_loss.1} parent=15 // pred_fallthru
        _
      // Predicated region
      $region21: #{softmax_heteroscedastic_loss.1} parent=15 // pred_check
        %p165 = pneg %p71
      $region22: #{softmax_heteroscedastic_loss.1} parent=15 // pred_check_branch
        %167 = sbr.rel (%p165) target = $region24
      $region23: #{softmax_heteroscedastic_loss.1} parent=15 // pred_region
        %s168 = smul.u32 2, %s17
        %p169 = scmp.lt.s32.totalorder %s16, 1
        %s170 = scalar_select %p169, %s16, 1
        %p171 = scmp.lt.s32.totalorder %s168, 1
        %s172 = scalar_select %p171, %s168, 1
        %s173 = smul.addr %s170, 2
        %s174 = sadd.s32 %s172, %s173
        %s175 = smul.addr %s174, 4
        %s176 = scalar_lea.vmem %s1, %s175
        %s177 = smul.u32 2, %s17
      $region24: #{softmax_heteroscedastic_loss.1} parent=15 // pred_fallthru
        _
      // Predicated region
      $region25: #{softmax_heteroscedastic_loss.1} parent=15 // pred_check
        %p178 = pneg %p99
      $region26: #{softmax_heteroscedastic_loss.1} parent=15 // pred_check_branch
        %180 = sbr.rel (%p178) target = $region28
      $region27: #{softmax_heteroscedastic_loss.1} parent=15 // pred_region
        %s181 = smul.u32 2, %s17
        %p182 = scmp.lt.s32.totalorder %s16, 1
        %s183 = scalar_select %p182, %s16, 1
        %p184 = scmp.lt.s32.totalorder %s181, 1
        %s185 = scalar_select %p184, %s181, 1
        %s186 = smul.addr %s183, 2
        %s187 = sadd.s32 %s185, %s186
        %s188 = smul.addr %s187, 4
        %s189 = scalar_lea.vmem %s2, %s188
        %s190 = smul.u32 2, %s17
      $region28: #{softmax_heteroscedastic_loss.1} parent=15 // pred_fallthru
        _
    $region16: #{softmax_heteroscedastic_loss.1} parent=5 // pred_fallthru
      _
    %p191 = scmp.le.s32.totalorder 1, %s9
    %p192 = scmp.lt.s32.totalorder %s9, 3
    %p193 = pnand %p191, %p192
    %p194 = pneg %p193
    // Predicated region
    $region29: #{softmax_heteroscedastic_loss.1} parent=5 // pred_check
      _
    $region30: #{softmax_heteroscedastic_loss.1} parent=5 // pred_check_branch
      %196 = sbr.rel (%p193) target = $region32
    $region31: #{softmax_heteroscedastic_loss.1} parent=5 // pred_region
      %s197 = ssub.s32 %s9, 1
      %s198 = smul.u32 2, %s19
      %p199 = scmp.lt.s32.totalorder %s18, 1
      %s200 = scalar_select %p199, %s18, 1
      %p201 = scmp.lt.s32.totalorder %s198, 1
      %s202 = scalar_select %p201, %s198, 1
      %s203 = smul.addr %s200, 2
      %s204 = sadd.s32 %s202, %s203
      %s205 = smul.addr %s204, 4
      %s206 = scalar_lea.vmem %s0, %s205
      %p207 = pneg %p49
      %p208 = pneg %p46
      %s209 = smul.u32 2, %s19
      %p210 = scmp.lt.s32.totalorder %s18, 1
      %s211 = scalar_select %p210, %s18, 1
      %p212 = scmp.lt.s32.totalorder %s209, 1
      %s213 = scalar_select %p212, %s209, 1
      %s214 = smul.addr %s211, 2
      %s215 = sadd.s32 %s213, %s214
      %s216 = smul.addr %s215, 4
      %s217 = scalar_lea.vmem %s1, %s216
      %p218 = pneg %p77
      %p219 = pneg %p74
      %s220 = smul.u32 2, %s19
      %p221 = scmp.lt.s32.totalorder %s18, 1
      %s222 = scalar_select %p221, %s18, 1
      %p223 = scmp.lt.s32.totalorder %s220, 1
      %s224 = scalar_select %p223, %s220, 1
      %s225 = smul.addr %s222, 2
      %s226 = sadd.s32 %s224, %s225
      %s227 = smul.addr %s226, 4
      %s228 = scalar_lea.vmem %s2, %s227
      %p229 = pneg %p105
      %p230 = pneg %p102
      %p231 = pneg %p133
      %p232 = pneg %p130
      %s233 = sadd.s32 %s18, %s19
      %p234 = scmp.lt.s32.totalorder %s233, 1
      %s235 = scalar_select %p234, %s233, 1
      %s236 = smul.addr %s235, 4
      %s237 = scalar_lea.vmem %s3, %s236
      %s238 = smul.u32 2, %s19
      %p239 = scmp.lt.s32.totalorder %s18, 1
      %s240 = scalar_select %p239, %s18, 1
      %p241 = scmp.lt.s32.totalorder %s238, 1
      %s242 = scalar_select %p241, %s238, 1
      %s243 = smul.addr %s240, 2
      %s244 = sadd.s32 %s242, %s243
      %s245 = smul.addr %s244, 4
      %s246 = scalar_lea.vmem %s0, %s245
      %s247 = smul.u32 2, %s19
      %s248 = smul.u32 2, %s19
      %p249 = scmp.lt.s32.totalorder %s18, 1
      %s250 = scalar_select %p249, %s18, 1
      %p251 = scmp.lt.s32.totalorder %s248, 1
      %s252 = scalar_select %p251, %s248, 1
      %s253 = smul.addr %s250, 2
      %s254 = sadd.s32 %s252, %s253
      %s255 = smul.addr %s254, 4
      %s256 = scalar_lea.vmem %s1, %s255
      %s257 = smul.u32 2, %s19
      %s258 = smul.u32 2, %s19
      %p259 = scmp.lt.s32.totalorder %s18, 1
      %s260 = scalar_select %p259, %s18, 1
      %p261 = scmp.lt.s32.totalorder %s258, 1
      %s262 = scalar_select %p261, %s258, 1
      %s263 = smul.addr %s260, 2
      %s264 = sadd.s32 %s262, %s263
      %s265 = smul.addr %s264, 4
      %s266 = scalar_lea.vmem %s2, %s265
      %s267 = smul.u32 2, %s19
      %s268 = sadd.s32 %s18, %s19
      %p269 = scmp.lt.s32.totalorder %s268, 1
      %s270 = scalar_select %p269, %s268, 1
      %s271 = smul.addr %s270, 4
      %s272 = scalar_lea.vmem %s3, %s271
      %s273 = sadd.s32 %s18, %s19
      %v274 = vld [vmem:[%s246] sm:$0xff]
      %v275 = vld [vmem:[%s256] sm:$0xff]
      %v276 = vld [vmem:[%s266] sm:$0xff]
      %v277 = vmul.f32 %v275, 0.5
      %v278 = vadd.f32 %v274, %v277
      %v279 = vmul.f32 %v278, 1.442695
      %v280 = vpow.pop %v279
      %v282 = vcombine.high %v280, %v280
      %vm284 = vcmask 1043456
      %v285 = vsel %vm284, %v280, 0.0
      %v286 = vrot.slane %v285, 4
      %v287 = vadd.f32 %v285, %v286
      %v288 = vrot.slane %v287, 2
      %v289 = vadd.f32 %v287, %v288
      %v290 = vrot.slane %v289, 1
      %v291 = vadd.f32 %v289, %v290
      %v292 = vsel %vm284, %v282, 0.0
      %v293 = vrot.slane %v292, 4
      %v294 = vadd.f32 %v292, %v293
      %v295 = vrot.slane %v294, 2
      %v296 = vadd.f32 %v294, %v295
      %v297 = vrot.slane %v296, 1
      %v298 = vadd.f32 %v296, %v297
      %v299 = vadd.f32 %v291, 1e-05
      %v300 = vadd.f32 %v298, 1e-05
      %v301 = vrcp.pop %v299
      %v302 = vmul.f32 1.0, %v301
      %v303 = vrcp.pop %v300
      %v304 = vmul.f32 1.0, %v303
      %v307 = vcombine.low %v302, %v304
      %v309 = vmul.f32 %v280, %v307
      %v310 = vsub.f32 %v276, %v309
      %v311 = vmul.f32 %v310, %v310
      %v313 = vcombine.high %v311, %v311
      %v315 = vsel %vm284, %v311, 0.0
      %v316 = vsel %vm284, %v313, 0.0
      %v317 = vadd.f32 %v315, %v316
      %318 = vadd.xlane.f32.xlu0 %v317
      %v319 = vpop.xlane.xlu0 %318
      %v320 = vlaneseq
      %v321 = vand.u32 %v320, 127
      %vm322 = vcmp.eq.s32.totalorder %v321, 0
      %v323 = vsel %vm322, %v319, 0.0
      %324 = vst [vmem:[%s272] sm:$0xf] %v323
      %s325 = sadd.s32 %s18, %s19
      %p326 = scmp.lt.s32.totalorder %s325, 1
      %s327 = scalar_select %p326, %s325, 1
      %s328 = smul.addr %s327, 4
      %s329 = scalar_lea.vmem %s3, %s328
      // Predicated region
      $region33: #{softmax_heteroscedastic_loss.1} parent=31 // pred_check
        %p330 = pneg %p130
      $region34: #{softmax_heteroscedastic_loss.1} parent=31 // pred_check_branch
        %332 = sbr.rel (%p330) target = $region36
      $region35: #{softmax_heteroscedastic_loss.1} parent=31 // pred_region
        %s333 = sadd.s32 %s18, %s19
      $region36: #{softmax_heteroscedastic_loss.1} parent=31 // pred_fallthru
        _
    $region32: #{softmax_heteroscedastic_loss.1} parent=5 // pred_fallthru
      _
    %p334 = scmp.le.s32.totalorder 2, %s9
    // Predicated region
    $region37: #{softmax_heteroscedastic_loss.1} parent=5 // pred_check
      %p335 = pneg %p334
    $region38: #{softmax_heteroscedastic_loss.1} parent=5 // pred_check_branch
      %337 = sbr.rel (%p335) target = $region40
    $region39: #{softmax_heteroscedastic_loss.1} parent=5 // pred_region
      %s338 = ssub.s32 %s9, 2
      // Predicated region
      $region41: #{softmax_heteroscedastic_loss.1} parent=39 // pred_check
        %p339 = pneg %p136
      $region42: #{softmax_heteroscedastic_loss.1} parent=39 // pred_check_branch
        %341 = sbr.rel (%p339) target = $region44
      $region43: #{softmax_heteroscedastic_loss.1} parent=39 // pred_region
        %s342 = sadd.s32 %s20, %s21
        %p343 = scmp.lt.s32.totalorder %s342, 1
        %s344 = scalar_select %p343, %s342, 1
        %s345 = smul.addr %s344, 4
        %s346 = scalar_lea.vmem %s3, %s345
      $region44: #{softmax_heteroscedastic_loss.1} parent=39 // pred_fallthru
        _
    $region40: #{softmax_heteroscedastic_loss.1} parent=5 // pred_fallthru
      _
  $region6: #{softmax_heteroscedastic_loss.1} parent=0 // loop_footer
    %s13 = sadd.s32 1, %s9
  $region7: #{softmax_heteroscedastic_loss.1} parent=0 // loop_footer_branch
    %8 = sbr.rel target = $region3
  $region8: #{softmax_heteroscedastic_loss.1} parent=0 // loop_exit
    _

</llo_original>
